<compile_context>
chip_gen: v6e
topology: v6e:2x2x1
jax: 0.10.0
libtpu: 0.0.40
codegen_flags: <defaults>
</compile_context>

<pallas_src>
import functools

import jax
import jax.numpy as jnp
from jax.experimental import pallas as pl
from jax.experimental.pallas import tpu as pltpu


VMEM_LIMIT = 32 * 1024 * 1024


# ----------------------------------------------------------------------------
# in-kernel helpers
# ----------------------------------------------------------------------------

def _point_dist_interleaved(a_ref, b_ref, C, L):
    """Per-point L2 distance for an interleaved (1, TR, L=128*C) block.

    Returns a (TR, L) array whose value at group-start lanes (lane % C == 0)
    is the distance of that point; other lanes hold garbage (window sums).
    """
    x = a_ref[0, :, :].astype(jnp.float32) - b_ref[0, :, :].astype(jnp.float32)
    d2 = x * x
    s = d2
    for k in range(1, C):          # C <= 3: static unroll; rolls hit the XLU
        s = s + pltpu.roll(d2, L - k, axis=1)   # s[l] += d2[(l + k) % L]
    return jnp.sqrt(s)


# ----------------------------------------------------------------------------
# kernels
# ----------------------------------------------------------------------------

def _dist_kernel(a_ref, b_ref, o_ref):
    # reduction='none' path: dense channel-major blocks, lane-dense output.
    C = a_ref.shape[1]
    d2 = jnp.zeros(o_ref.shape[1:], jnp.float32)      # (TR, 128)
    for c in range(C):                                 # static unroll
        diff = (a_ref[0, c, :, :].astype(jnp.float32)
                - b_ref[0, c, :, :].astype(jnp.float32))
        d2 = d2 + diff * diff
    o_ref[...] = jnp.sqrt(d2)[None]


def _reduce_kernel(G, C, last, row_ragged, a_ref, b_ref, sum_ref, acc):
    # mask=None reduce path: per-batch sum of distances (count == N, static).
    j = pl.program_id(1)
    TR, L = acc.shape

    @pl.when(j == 0)
    def _():
        acc[...] = jnp.zeros_like(acc)

    d = _point_dist_interleaved(a_ref, b_ref, C, L)
    if C > 1:
        lane = jax.lax.broadcasted_iota(jnp.int32, (TR, L), 1)
        gstart = (lane % C) == 0
    else:
        gstart = None

    def contrib(row_mask):
        keep = gstart
        if row_mask is not None:
            keep = row_mask if keep is None else jnp.logical_and(keep, row_mask)
        return d if keep is None else jnp.where(keep, d, 0.0)

    if row_ragged:
        @pl.when(j == last)
        def _():
            row = jax.lax.broadcasted_iota(jnp.int32, (TR, L), 0)
            acc[...] += contrib((j * TR + row) < G)

        @pl.when(j != last)
        def _():
            acc[...] += contrib(None)
    else:
        acc[...] += contrib(None)

    @pl.when(j == pl.num_programs(1) - 1)
    def _():
        part = jnp.sum(acc[...], axis=0, keepdims=True)        # (1, L)
        sum_ref[...] = jnp.sum(part, axis=1, keepdims=True)[None]


def _reduce_masked_kernel(G, C, last, row_ragged, a_ref, b_ref, m_ref,
                          sum_ref, cnt_ref, acc_s, acc_c):
    # masked 'mean_bs' path: per-batch masked sum + mask count.
    j = pl.program_id(1)
    TR, L = acc_s.shape

    @pl.when(j == 0)
    def _():
        acc_s[...] = jnp.zeros_like(acc_s)
        acc_c[...] = jnp.zeros_like(acc_c)

    d = _point_dist_interleaved(a_ref, b_ref, C, L)
    mf = m_ref[0, :, :].astype(jnp.float32)            # 0.0 / 1.0 (finite)
    if C > 1:
        lane = jax.lax.broadcasted_iota(jnp.int32, (TR, L), 1)
        gstart = (lane % C) == 0
    else:
        gstart = None

    def accumulate(row_mask):
        keep = gstart
        if row_mask is not None:
            keep = row_mask if keep is None else jnp.logical_and(keep, row_mask)
        if keep is None:
            acc_s[...] += d * mf
            acc_c[...] += mf
        else:
            # where before the multiply so tail garbage / NaN never leaks in
            acc_s[...] += jnp.where(keep, d, 0.0) * mf
            acc_c[...] += jnp.where(keep, mf, 0.0)

    if row_ragged:
        @pl.when(j == last)
        def _():
            row = jax.lax.broadcasted_iota(jnp.int32, (TR, L), 0)
            accumulate((j * TR + row) < G)

        @pl.when(j != last)
        def _():
            accumulate(None)
    else:
        accumulate(None)

    @pl.when(j == pl.num_programs(1) - 1)
    def _():
        ps = jnp.sum(acc_s[...], axis=0, keepdims=True)
        sum_ref[...] = jnp.sum(ps, axis=1, keepdims=True)[None]
        pc = jnp.sum(acc_c[...], axis=0, keepdims=True)
        cnt_ref[...] = jnp.sum(pc, axis=1, keepdims=True)[None]


# ----------------------------------------------------------------------------
# pallas_call wrappers
# ----------------------------------------------------------------------------

def _run_dist(a_r, b_r, TR):
    B, C, Nr, _ = a_r.shape
    n_steps = -(-Nr // TR)
    return pl.pallas_call(
        _dist_kernel,
        out_shape=jax.ShapeDtypeStruct((B, Nr, 128), jnp.float32),
        grid_spec=pltpu.PrefetchScalarGridSpec(
            num_scalar_prefetch=0,
            grid=(B, n_steps),
            in_specs=[
                pl.BlockSpec((1, C, TR, 128), lambda b, j: (b, 0, j, 0)),
                pl.BlockSpec((1, C, TR, 128), lambda b, j: (b, 0, j, 0)),
            ],
            out_specs=pl.BlockSpec((1, TR, 128), lambda b, j: (b, j, 0)),
        ),
        compiler_params=pltpu.CompilerParams(
            dimension_semantics=("parallel", "parallel"),
            vmem_limit_bytes=VMEM_LIMIT),
    )(a_r, b_r)


def _run_reduce(a3, b3, G, C, TR, L):
    B = a3.shape[0]
    n_steps = -(-G // TR)
    row_ragged = (G % TR) != 0
    out = pl.pallas_call(
        functools.partial(_reduce_kernel, G, C, n_steps - 1, row_ragged),
        out_shape=jax.ShapeDtypeStruct((B, 1, 1), jnp.float32),
        grid_spec=pltpu.PrefetchScalarGridSpec(
            num_scalar_prefetch=0,
            grid=(B, n_steps),
            in_specs=[
                pl.BlockSpec((1, TR, L), lambda b, j: (b, j, 0)),
                pl.BlockSpec((1, TR, L), lambda b, j: (b, j, 0)),
            ],
            out_specs=pl.BlockSpec((1, 1, 1), lambda b, j: (b, 0, 0)),
            scratch_shapes=[pltpu.VMEM((TR, L), jnp.float32)],
        ),
        compiler_params=pltpu.CompilerParams(
            dimension_semantics=("parallel", "arbitrary"),
            vmem_limit_bytes=VMEM_LIMIT),
    )(a3, b3)
    return out[:, 0, 0]


def _run_reduce_masked(a3, b3, m3, G, C, TR, L):
    B = a3.shape[0]
    n_steps = -(-G // TR)
    row_ragged = (G % TR) != 0
    sums, cnts = pl.pallas_call(
        functools.partial(_reduce_masked_kernel, G, C, n_steps - 1, row_ragged),
        out_shape=(jax.ShapeDtypeStruct((B, 1, 1), jnp.float32),
                   jax.ShapeDtypeStruct((B, 1, 1), jnp.float32)),
        grid_spec=pltpu.PrefetchScalarGridSpec(
            num_scalar_prefetch=0,
            grid=(B, n_steps),
            in_specs=[
                pl.BlockSpec((1, TR, L), lambda b, j: (b, j, 0)),
                pl.BlockSpec((1, TR, L), lambda b, j: (b, j, 0)),
                pl.BlockSpec((1, TR, L), lambda b, j: (b, j, 0)),
            ],
            out_specs=[pl.BlockSpec((1, 1, 1), lambda b, j: (b, 0, 0)),
                       pl.BlockSpec((1, 1, 1), lambda b, j: (b, 0, 0))],
            scratch_shapes=[pltpu.VMEM((TR, L), jnp.float32),
                            pltpu.VMEM((TR, L), jnp.float32)],
        ),
        compiler_params=pltpu.CompilerParams(
            dimension_semantics=("parallel", "arbitrary"),
            vmem_limit_bytes=VMEM_LIMIT),
    )(a3, b3, m3)
    return sums[:, 0, 0], cnts[:, 0, 0]


# ----------------------------------------------------------------------------
# public forward (JAX/Pallas equivalent of LLoss.forward with L2 distance)
# ----------------------------------------------------------------------------

def lloss_forward(a, b, mask=None, reduction=None, default_reduction="mean",
                  tile_rows=1024):
    """a, b: (B, H, W, C) with 1 <= C <= 3; mask: optional bool (B, H, W).

    `tile_rows` is the sublane tile size (rows of 128*C lanes); sweep
    256..2048 for very large N.
    """
    assert a.shape == b.shape and a.ndim == 4 and 1 <= a.shape[-1] <= 3, \
        f"Bad shape = {a.shape}"
    B, H, W, C = a.shape
    N = H * W
    L = 128 * C
    # multiple of 32 so f32 / bf16 / int8 blocks all satisfy TPU sublane tiling
    TR = max(32, (int(tile_rows) // 32) * 32)

    red = default_reduction if reduction is None else reduction

    if mask is None and red == "none":
        # Only path that needs channel-major data: dist must come out
        # point-contiguous.  Dense (1, C, TR, 128) blocks, lane-dense output.
        Nr = -(-N // 128)
        pad = Nr * 128 - N
        a_t = jnp.transpose(a.reshape(B, N, C), (0, 2, 1))
        b_t = jnp.transpose(b.reshape(B, N, C), (0, 2, 1))
        if pad:
            a_t = jnp.pad(a_t, ((0, 0), (0, 0), (0, pad)))
            b_t = jnp.pad(b_t, ((0, 0), (0, 0), (0, pad)))
        a_r = a_t.reshape(B, C, Nr, 128)
        b_r = b_t.reshape(B, C, Nr, 128)
        dist = _run_dist(a_r, b_r, min(TR, Nr)).reshape(B, Nr * 128)
        if pad:
            dist = dist[:, :N]
        return dist.reshape(B, H, W)

    # Reduce paths: transpose-free.  (B, H, W, C) -> free (B, N*C) view,
    # zero-padded to whole rows of L = 128*C lanes (zeros contribute nothing).
    NC = N * C
    G = -(-NC // L)
    padf = G * L - NC

    def to_rows(x):
        xf = x.reshape(B, NC)
        if padf:
            xf = jnp.pad(xf, ((0, 0), (0, padf)))
        return xf.reshape(B, G, L)

    a3, b3 = to_rows(a), to_rows(b)
    TRr = min(TR, G)

    if mask is not None:
        assert reduction == "mean_bs"
        # Expand the per-point mask to the interleaved per-element layout
        # (int8, 1 byte per element; small vs the 8*C bytes/point of a+b).
        m = jnp.broadcast_to(mask.reshape(B, N, 1), (B, N, C))
        m = m.reshape(B, NC).astype(jnp.int8)
        if padf:
            m = jnp.pad(m, ((0, 0), (0, padf)))
        m3 = m.reshape(B, G, L)
        s, c = _run_reduce_masked(a3, b3, m3, G, C, TRr, L)
        return jnp.where(c > 0, s / jnp.maximum(c, 1.0), 0.0)

    sums = _run_reduce(a3, b3, G, C, TRr, L)           # (B,)
    if red == "sum":
        return jnp.sum(sums)
    if red == "mean":
        return jnp.sum(sums) / float(B * N)
    if red == "mean_bs":
        return sums / float(N)
    raise ValueError(f"bad reduction={red!r} mode")


# ----------------------------------------------------------------------------
# pure-JAX reference + self-test
# ----------------------------------------------------------------------------

def _reference(a, b, mask=None, reduction="mean"):
    dist = jnp.sqrt(jnp.sum((a.astype(jnp.float32) - b.astype(jnp.float32)) ** 2,
                            axis=-1))
    if mask is not None:
        m = mask.astype(jnp.float32)
        s = jnp.sum(dist * m, axis=(1, 2))
        c = jnp.sum(m, axis=(1, 2))
        return jnp.where(c > 0, s / jnp.maximum(c, 1.0), 0.0)
    if reduction == "none":
        return dist
    if reduction == "sum":
        return jnp.sum(dist)
    if reduction == "mean":
        return jnp.mean(dist)
    if reduction == "mean_bs":
        return jnp.mean(dist, axis=(1, 2))
    raise ValueError(reduction)


def _check(a, b, mask, reductions):
    ok = True
    for red in reductions:
        if red == "masked":
            got = jax.block_until_ready(
                lloss_forward(a, b, mask=mask, reduction="mean_bs"))
            want = _reference(a, b, mask=mask)
        else:
            got = jax.block_until_ready(lloss_forward(a, b, reduction=red))
            want = _reference(a, b, reduction=red)
        good = bool(jnp.allclose(got, want, atol=1e-4, rtol=1e-5))
        if not good:
            print(f"MISMATCH shape={a.shape} reduction={red}")
        ok &= good
    return ok


def _make(key, shape):
    k1, k2, k3 = jax.random.split(key, 3)
    a = jax.random.normal(k1, shape, jnp.float32)
    b = jax.random.normal(k2, shape, jnp.float32)
    mask = jax.random.uniform(k3, shape[:-1]) > 0.5
    return a, b, mask


if __name__ == "__main__":
    key = jax.random.PRNGKey(0)
    ok = True

    full = ("none", "sum", "mean", "mean_bs", "masked")
    lite = ("mean", "none", "masked")

    # C=3, N=128 (exact rows, no padding)
    key, k = jax.random.split(key)
    a, b, m = _make(k, (2, 8, 16, 3))
    ok &= _check(a, b, m, full)

    # C=3, N=160 (ragged: flat view zero-padded to whole rows)
    key, k = jax.random.split(key)
    a, b, m = _make(k, (2, 8, 20, 3))
    ok &= _check(a, b, m, full)

    # C=2, B=1 (exercises the single-roll path and a B==1 grid)
    key, k = jax.random.split(key)
    a, b, m = _make(k, (1, 8, 16, 2))
    ok &= _check(a, b, m, lite)

    # C=1, tiny N=32 (< 128: heavy element padding, no rolls)
    key, k = jax.random.split(key)
    a, b, m = _make(k, (2, 4, 8, 1))
    ok &= _check(a, b, m, lite)

    print("KERNEL_OK" if ok else "MISMATCH")
</pallas_src>

<mosaic_0001>
module attributes {stable_mosaic.version = 11 : i64} {
  func.func @_dist_kernel(%arg0: i32, %arg1: i32, %arg2: memref<1x3x1x128xf32, #tpu.memory_space<vmem>>, %arg3: memref<1x3x1x128xf32, #tpu.memory_space<vmem>>, %arg4: memref<1x1x128xf32, #tpu.memory_space<vmem>>) attributes {dimension_semantics = [#tpu.dimension_semantics<parallel>, #tpu.dimension_semantics<parallel>], iteration_bounds = array<i64: 2, 1>, scalar_prefetch = 0 : i64, scratch_operands = 0 : i64, tpu.core_type = #tpu.core_type<tc>, window_params = [{transform_indices = @transform_0, window_bounds = array<i64: 1, 3, 1, 128>}, {transform_indices = @transform_1, window_bounds = array<i64: 1, 3, 1, 128>}, {transform_indices = @transform_2, window_bounds = array<i64: 1, 1, 128>}]} {
    %cst = arith.constant 0.000000e+00 : f32
    %0 = vector.broadcast %cst : f32 to vector<1x128xf32>
    %c0 = arith.constant 0 : index
    %c0_0 = arith.constant 0 : index
    %c0_1 = arith.constant 0 : index
    %c0_2 = arith.constant 0 : index
    %1 = vector.load %arg2[%c0, %c0_0, %c0_1, %c0_2] : memref<1x3x1x128xf32, #tpu.memory_space<vmem>>, vector<1x1x1x128xf32>
    %2 = vector.shape_cast %1 : vector<1x1x1x128xf32> to vector<1x128xf32>
    %c0_3 = arith.constant 0 : index
    %c0_4 = arith.constant 0 : index
    %c0_5 = arith.constant 0 : index
    %c0_6 = arith.constant 0 : index
    %3 = vector.load %arg3[%c0_3, %c0_4, %c0_5, %c0_6] : memref<1x3x1x128xf32, #tpu.memory_space<vmem>>, vector<1x1x1x128xf32>
    %4 = vector.shape_cast %3 : vector<1x1x1x128xf32> to vector<1x128xf32>
    %5 = arith.subf %2, %4 : vector<1x128xf32>
    %6 = arith.mulf %5, %5 : vector<1x128xf32>
    %7 = arith.addf %0, %6 : vector<1x128xf32>
    %c0_7 = arith.constant 0 : index
    %c1 = arith.constant 1 : index
    %c0_8 = arith.constant 0 : index
    %c0_9 = arith.constant 0 : index
    %8 = vector.load %arg2[%c0_7, %c1, %c0_8, %c0_9] : memref<1x3x1x128xf32, #tpu.memory_space<vmem>>, vector<1x1x1x128xf32>
    %9 = vector.shape_cast %8 : vector<1x1x1x128xf32> to vector<1x128xf32>
    %c0_10 = arith.constant 0 : index
    %c1_11 = arith.constant 1 : index
    %c0_12 = arith.constant 0 : index
    %c0_13 = arith.constant 0 : index
    %10 = vector.load %arg3[%c0_10, %c1_11, %c0_12, %c0_13] : memref<1x3x1x128xf32, #tpu.memory_space<vmem>>, vector<1x1x1x128xf32>
    %11 = vector.shape_cast %10 : vector<1x1x1x128xf32> to vector<1x128xf32>
    %12 = arith.subf %9, %11 : vector<1x128xf32>
    %13 = arith.mulf %12, %12 : vector<1x128xf32>
    %14 = arith.addf %7, %13 : vector<1x128xf32>
    %c0_14 = arith.constant 0 : index
    %c2 = arith.constant 2 : index
    %c0_15 = arith.constant 0 : index
    %c0_16 = arith.constant 0 : index
    %15 = vector.load %arg2[%c0_14, %c2, %c0_15, %c0_16] : memref<1x3x1x128xf32, #tpu.memory_space<vmem>>, vector<1x1x1x128xf32>
    %16 = vector.shape_cast %15 : vector<1x1x1x128xf32> to vector<1x128xf32>
    %c0_17 = arith.constant 0 : index
    %c2_18 = arith.constant 2 : index
    %c0_19 = arith.constant 0 : index
    %c0_20 = arith.constant 0 : index
    %17 = vector.load %arg3[%c0_17, %c2_18, %c0_19, %c0_20] : memref<1x3x1x128xf32, #tpu.memory_space<vmem>>, vector<1x1x1x128xf32>
    %18 = vector.shape_cast %17 : vector<1x1x1x128xf32> to vector<1x128xf32>
    %19 = arith.subf %16, %18 : vector<1x128xf32>
    %20 = arith.mulf %19, %19 : vector<1x128xf32>
    %21 = arith.addf %14, %20 : vector<1x128xf32>
    %22 = math.sqrt %21 : vector<1x128xf32>
    %23 = vector.shape_cast %22 : vector<1x128xf32> to vector<1x1x128xf32>
    %c0_21 = arith.constant 0 : index
    %c0_22 = arith.constant 0 : index
    %c0_23 = arith.constant 0 : index
    %24 = vector.load %arg4[%c0_21, %c0_22, %c0_23] : memref<1x1x128xf32, #tpu.memory_space<vmem>>, vector<1x1x128xf32>
    tpu.vector_store %arg4[%c0_21, %c0_22, %c0_23], %23 {strides = array<i32>} : memref<1x1x128xf32, #tpu.memory_space<vmem>>, vector<1x1x128xf32>,
    return
  }
  func.func @transform_0(%arg0: i32, %arg1: i32) -> (i32, i32, i32, i32) {
    %c0_i32 = arith.constant 0 : i32
    %c0_i32_0 = arith.constant 0 : i32
    %c0_i32_1 = arith.constant 0 : i32
    return %arg0, %c0_i32, %arg1, %c0_i32_0 : i32, i32, i32, i32
  }
  func.func @transform_1(%arg0: i32, %arg1: i32) -> (i32, i32, i32, i32) {
    %c0_i32 = arith.constant 0 : i32
    %c0_i32_0 = arith.constant 0 : i32
    %c0_i32_1 = arith.constant 0 : i32
    return %arg0, %c0_i32, %arg1, %c0_i32_0 : i32, i32, i32, i32
  }
  func.func @transform_2(%arg0: i32, %arg1: i32) -> (i32, i32, i32) {
    %c0_i32 = arith.constant 0 : i32
    %c0_i32_0 = arith.constant 0 : i32
    return %arg0, %arg1, %c0_i32 : i32, i32, i32
  }
}

</mosaic_0001>

<llo_original>
// kernel: tpu_custom_call.1
$region0: #{tpu_custom_call.1}
  #allocation0 [shape = 'u32[]', space=smem, size = 0x4, offset = 0x4, fixed_abs, tag = 'smem constant byte address 0x4 - core index']
  #allocation1 [shape = 'u32[144,128]{1,0:T(1,128)}', space=vmem, size = 0x12000, scoped, tag = 'internal scratch']
  %s0 = inlined_call_operand.hbm [shape: f32[2,3,1,128], index: 0, kind: input, shape index: {}]
  %s1 = inlined_call_operand.hbm [shape: f32[2,3,1,128], index: 1, kind: input, shape index: {}]
  %s2 = inlined_call_operand.hbm [shape: f32[2,1,128], index: 2, kind: output, shape index: {}]
  %s3 = sld [smem:[#allocation0]]
  $region49: #{tpu_custom_call.1} parent=0
    _
  %s5 = ssub.s32 1, %s3
  %s6 = scalar_select 0, %s5, %s3
  $region1: #{tpu_custom_call.1} parent=0
    #allocation2 [shape = 'u8[3072]{0}', space=vmem, size = 0xc00, scoped, tag = 'input window, operand 0']
    #allocation3 [shape = 's32[2]{0}', space=sflag, size = 0x8, scoped, tag = 'scoped memory for tpu_custom_call.1']
    #allocation4 [shape = 's32[2]{0}', space=sflag, size = 0x8, scoped, tag = 'scoped memory for tpu_custom_call.1']
    #allocation5 [shape = 'u8[3072]{0}', space=vmem, size = 0xc00, scoped, tag = 'input window, operand 1']
    #allocation6 [shape = 's32[2]{0}', space=sflag, size = 0x8, scoped, tag = 'scoped memory for tpu_custom_call.1']
    #allocation7 [shape = 'u8[1024]{0}', space=vmem, size = 0x400, scoped, tag = 'output window, operand 0']
    %7 = vsyncpa [#allocation3], 0
    %s8 = scalar_lea.sflag [#allocation3], 1
    %9 = vsyncpa %s8, 0
    %10 = vsyncpa [#allocation6], 0
    %s11 = scalar_lea.sflag [#allocation6], 1
    %12 = vsyncpa %s11, 0
    %13 = vsyncpa [#allocation4], 0
    %s14 = scalar_lea.sflag [#allocation4], 1
    %15 = vsyncpa %s14, 0
    loop: start=0, step=1, limit=4
    $region2: #{tpu_custom_call.1} parent=1 // loop_pre_header
      _
    $region3: #{tpu_custom_call.1} parent=1 // loop_header
      %s17 = sphi 0, %s21
      %p18 = scmp.ge.s32.totalorder %s17, 4
      %s24 = sphi 0, %s36
      %s25 = sphi 0, %s32
      %s26 = sphi 0, %s24
      %s27 = sphi 0, %s25
      %s28 = sphi 0, %s26
      %s29 = sphi 0, %s27
      %s41 = sphi 0, %s43
      %s44 = sphi 0, %s41
      %s45 = sphi 0, %s44
      %s61 = sphi 0, %s45
      %s69 = sphi 0, %s71
      %s72 = sphi 0, %s69
      %s73 = sphi 0, %s72
      %s89 = sphi 0, %s73
      %s97 = sphi 0, %s99
      %s100 = sphi 0, %s97
      %s101 = sphi 0, %s100
      %s117 = sphi 0, %s101
    $region4: #{tpu_custom_call.1} parent=1 // loop_header_branch
      %20 = sbr.rel (%p18) target = $region8
    $region5: #{tpu_custom_call.1} parent=1 // loop_body
      %s22 = ssub.s32 %s17, 1
      %s23 = ssub.s32 %s17, 2
      %s30 = sadd.s32 1, %s25
      %p31 = scmp.ge.s32.totalorder %s30, 1
      %s32 = scalar_select %p31, 0, %s30
      %s33 = sadd.s32 1, %s24
      %s34 = scalar_select %p31, %s33, %s24
      %p35 = scmp.ge.s32.totalorder %s34, 2
      %s36 = scalar_select %p35, 0, %s34
      %s37 = ssub.s32 %s24, %s36
      %s38 = ssub.s32 %s25, %s32
      %s39 = sor.u32 %s37, %s38
      %p40 = scmp.eq.s32.totalorder %s39, 0
      %s42 = sadd.s32 %s41, 1
      %s43 = scalar_select %p40, %s41, %s42
      %p46 = pneg %p40
      %p47 = scmp.eq.s32.totalorder %s17, 1
      %p48 = por %p46, %p47
      %p49 = scmp.ne.s32.totalorder %s41, %s44
      %p50 = scmp.eq.s32.totalorder %s17, 0
      %p51 = por %p49, %p50
      %p52 = scmp.ne.s32.totalorder %s41, %s44
      %p53 = scmp.eq.s32.totalorder %s22, 1
      %p54 = por %p52, %p53
      %p55 = scmp.ne.s32.totalorder %s44, %s45
      %p56 = scmp.eq.s32.totalorder %s22, 0
      %p57 = por %p55, %p56
      %p58 = scmp.ne.s32.totalorder %s44, %s45
      %p59 = scmp.eq.s32.totalorder %s23, 1
      %p60 = por %p58, %p59
      %p62 = scmp.ne.s32.totalorder %s45, %s61
      %p63 = scmp.eq.s32.totalorder %s23, 0
      %p64 = por %p62, %p63
      %s65 = ssub.s32 %s24, %s36
      %s66 = ssub.s32 %s25, %s32
      %s67 = sor.u32 %s65, %s66
      %p68 = scmp.eq.s32.totalorder %s67, 0
      %s70 = sadd.s32 %s69, 1
      %s71 = scalar_select %p68, %s69, %s70
      %p74 = pneg %p68
      %p75 = scmp.eq.s32.totalorder %s17, 1
      %p76 = por %p74, %p75
      %p77 = scmp.ne.s32.totalorder %s69, %s72
      %p78 = scmp.eq.s32.totalorder %s17, 0
      %p79 = por %p77, %p78
      %p80 = scmp.ne.s32.totalorder %s69, %s72
      %p81 = scmp.eq.s32.totalorder %s22, 1
      %p82 = por %p80, %p81
      %p83 = scmp.ne.s32.totalorder %s72, %s73
      %p84 = scmp.eq.s32.totalorder %s22, 0
      %p85 = por %p83, %p84
      %p86 = scmp.ne.s32.totalorder %s72, %s73
      %p87 = scmp.eq.s32.totalorder %s23, 1
      %p88 = por %p86, %p87
      %p90 = scmp.ne.s32.totalorder %s73, %s89
      %p91 = scmp.eq.s32.totalorder %s23, 0
      %p92 = por %p90, %p91
      %s93 = ssub.s32 %s24, %s36
      %s94 = ssub.s32 %s25, %s32
      %s95 = sor.u32 %s93, %s94
      %p96 = scmp.eq.s32.totalorder %s95, 0
      %s98 = sadd.s32 %s97, 1
      %s99 = scalar_select %p96, %s97, %s98
      %p102 = pneg %p96
      %p103 = scmp.eq.s32.totalorder %s17, 1
      %p104 = por %p102, %p103
      %p105 = scmp.ne.s32.totalorder %s97, %s100
      %p106 = scmp.eq.s32.totalorder %s17, 0
      %p107 = por %p105, %p106
      %p108 = scmp.ne.s32.totalorder %s97, %s100
      %p109 = scmp.eq.s32.totalorder %s22, 1
      %p110 = por %p108, %p109
      %p111 = scmp.ne.s32.totalorder %s100, %s101
      %p112 = scmp.eq.s32.totalorder %s22, 0
      %p113 = por %p111, %p112
      %p114 = scmp.ne.s32.totalorder %s100, %s101
      %p115 = scmp.eq.s32.totalorder %s23, 1
      %p116 = por %p114, %p115
      %p118 = scmp.ne.s32.totalorder %s101, %s117
      %p119 = scmp.eq.s32.totalorder %s23, 0
      %p120 = por %p118, %p119
      %p121 = scmp.le.s32.totalorder 1, %s17
      %p122 = scmp.lt.s32.totalorder %s17, 3
      %p123 = pnand %p121, %p122
      %p124 = pneg %p123
      // Predicated region
      $region9: #{tpu_custom_call.1} parent=5 // pred_check
        _
      $region10: #{tpu_custom_call.1} parent=5 // pred_check_branch
        %126 = sbr.rel (%p123) target = $region12
      $region11: #{tpu_custom_call.1} parent=5 // pred_region
        %s127 = ssub.s32 %s17, 1
      $region12: #{tpu_custom_call.1} parent=5 // pred_fallthru
        _
      %p128 = scmp.lt.s32.totalorder %s17, 2
      // Predicated region
      $region13: #{tpu_custom_call.1} parent=5 // pred_check
        %p129 = pneg %p128
      $region14: #{tpu_custom_call.1} parent=5 // pred_check_branch
        %131 = sbr.rel (%p129) target = $region16
      $region15: #{tpu_custom_call.1} parent=5 // pred_region
        // Predicated region
        $region17: #{tpu_custom_call.1} parent=15 // pred_check
          %p132 = pneg %p51
        $region18: #{tpu_custom_call.1} parent=15 // pred_check_branch
          %134 = sbr.rel (%p132) target = $region20
        $region19: #{tpu_custom_call.1} parent=15 // pred_region
          %s135 = sand.u32 %s41, 1
          %s136 = scalar_lea.sflag [#allocation3], %s135
          %s137 = sand.u32 %s41, 1
          %s138 = smul.addr %s137, 3
          %s139 = scalar_lea.vmem [#allocation2], %s138
          %s141 = ssub.s32 48, 48
          %142 = vsyncadd %s136, %s141
          %s143 = smul.addr %s24, 3
          %s144 = sadd.s32 %s25, %s143
          %s145 = smul.addr %s144, 16
          %s146 = scalar_lea.hbm %s0, %s145
          %s147 = sshll.u32 %s139, 4
          %s148 = int_to_ptr.vmem [resolvable:$true] %s147
          %153 = dma.hbm_to_vmem [thread:$0]  %s146, 48, %s148, %s136, 16, 16, 1
        $region20: #{tpu_custom_call.1} parent=15 // pred_fallthru
          _
        // Predicated region
        $region21: #{tpu_custom_call.1} parent=15 // pred_check
          %p154 = pneg %p79
        $region22: #{tpu_custom_call.1} parent=15 // pred_check_branch
          %156 = sbr.rel (%p154) target = $region24
        $region23: #{tpu_custom_call.1} parent=15 // pred_region
          %s157 = sand.u32 %s69, 1
          %s158 = scalar_lea.sflag [#allocation6], %s157
          %s159 = sand.u32 %s69, 1
          %s160 = smul.addr %s159, 3
          %s161 = scalar_lea.vmem [#allocation5], %s160
          %s163 = ssub.s32 48, 48
          %164 = vsyncadd %s158, %s163
          %s165 = smul.addr %s24, 3
          %s166 = sadd.s32 %s25, %s165
          %s167 = smul.addr %s166, 16
          %s168 = scalar_lea.hbm %s1, %s167
          %s169 = sshll.u32 %s161, 4
          %s170 = int_to_ptr.vmem [resolvable:$true] %s169
          %175 = dma.hbm_to_vmem [thread:$0]  %s168, 48, %s170, %s158, 16, 16, 1
        $region24: #{tpu_custom_call.1} parent=15 // pred_fallthru
          _
      $region16: #{tpu_custom_call.1} parent=5 // pred_fallthru
        _
      %p176 = scmp.le.s32.totalorder 1, %s17
      %p177 = scmp.lt.s32.totalorder %s17, 3
      %p178 = pnand %p176, %p177
      %p179 = pneg %p178
      // Predicated region
      $region25: #{tpu_custom_call.1} parent=5 // pred_check
        _
      $region26: #{tpu_custom_call.1} parent=5 // pred_check_branch
        %181 = sbr.rel (%p178) target = $region28
      $region27: #{tpu_custom_call.1} parent=5 // pred_region
        %s182 = ssub.s32 %s17, 1
        %s183 = sand.u32 %s44, 1
        %s184 = scalar_lea.sflag [#allocation3], %s183
        %s185 = sand.u32 %s44, 1
        %s186 = smul.addr %s185, 3
        %s187 = scalar_lea.vmem [#allocation2], %s186
        // Predicated region
        $region29: #{tpu_custom_call.1} parent=27 // pred_check
          %p188 = pneg %p57
        $region30: #{tpu_custom_call.1} parent=27 // pred_check_branch
          %190 = sbr.rel (%p188) target = $region32
        $region31: #{tpu_custom_call.1} parent=27 // pred_region
          %191 = dma.done %s184, 48
        $region32: #{tpu_custom_call.1} parent=27 // pred_fallthru
          _
        %s192 = sand.u32 %s72, 1
        %s193 = scalar_lea.sflag [#allocation6], %s192
        %s194 = sand.u32 %s72, 1
        %s195 = smul.addr %s194, 3
        %s196 = scalar_lea.vmem [#allocation5], %s195
        // Predicated region
        $region33: #{tpu_custom_call.1} parent=27 // pred_check
          %p197 = pneg %p85
        $region34: #{tpu_custom_call.1} parent=27 // pred_check_branch
          %199 = sbr.rel (%p197) target = $region36
        $region35: #{tpu_custom_call.1} parent=27 // pred_region
          %200 = dma.done %s193, 48
        $region36: #{tpu_custom_call.1} parent=27 // pred_fallthru
          _
        %s201 = sand.u32 %s44, 1
        %s202 = scalar_lea.sflag [#allocation3], %s201
        %s203 = sand.u32 %s44, 1
        %s204 = smul.addr %s203, 3
        %s205 = scalar_lea.vmem [#allocation2], %s204
        %p206 = pneg %p57
        %p207 = pneg %p54
        %s208 = sand.u32 %s72, 1
        %s209 = scalar_lea.sflag [#allocation6], %s208
        %s210 = sand.u32 %s72, 1
        %s211 = smul.addr %s210, 3
        %s212 = scalar_lea.vmem [#allocation5], %s211
        %p213 = pneg %p85
        %p214 = pneg %p82
        %p215 = pneg %p113
        %p216 = pneg %p110
        %s217 = sand.u32 %s100, 1
        %s218 = scalar_lea.sflag [#allocation4], %s217
        %s219 = sand.u32 %s100, 1
        %s220 = scalar_lea.vmem [#allocation7], %s219
        %v221 = vld [vmem:[%s187] sm:$0x1]
        %v222 = vld [vmem:[%s196] sm:$0x1]
        %v223 = vsub.f32 %v221, %v222
        %v224 = vmul.f32 %v223, %v223
        %v225 = vadd.f32 %v224, 0.0
        %s226 = scalar_lea.vmem %s187, 1 [#allocation2]
        %v227 = vld [vmem:[%s226] sm:$0x1]
        %s228 = scalar_lea.vmem %s196, 1 [#allocation5]
        %v229 = vld [vmem:[%s228] sm:$0x1]
        %v230 = vsub.f32 %v227, %v229
        %v231 = vmul.f32 %v230, %v230
        %v232 = vadd.f32 %v225, %v231
        %s233 = scalar_lea.vmem %s187, 2 [#allocation2]
        %v234 = vld [vmem:[%s233] sm:$0x1]
        %s235 = scalar_lea.vmem %s196, 2 [#allocation5]
        %v236 = vld [vmem:[%s235] sm:$0x1]
        %v237 = vsub.f32 %v234, %v236
        %v238 = vmul.f32 %v237, %v237
        %v239 = vadd.f32 %v232, %v238
        %v240 = vrsqrt.pop %v239
        %v241 = vmul.f32 %v239, %v240
        %vm242 = vcmp.eq.f32.partialorder %v239, inf
        %v243 = vsel %vm242, %v239, %v241
        %vm244 = vcmp.eq.f32.partialorder %v239, 0.0
        %v245 = vand.u32 %v239, 2147483648
        %v246 = vsel %vm244, %v245, %v243
        %247 = vst [vmem:[%s220] sm:$0x1] %v246
        %s248 = sand.u32 %s100, 1
        %s249 = scalar_lea.sflag [#allocation4], %s248
        %s250 = sand.u32 %s100, 1
        %s251 = scalar_lea.vmem [#allocation7], %s250
        // Predicated region
        $region37: #{tpu_custom_call.1} parent=27 // pred_check
          %p252 = pneg %p110
        $region38: #{tpu_custom_call.1} parent=27 // pred_check_branch
          %254 = sbr.rel (%p252) target = $region40
        $region39: #{tpu_custom_call.1} parent=27 // pred_region
          %s256 = ssub.s32 16, 16
          %257 = vsyncadd %s249, %s256
          %s258 = sadd.s32 %s27, %s26
          %s259 = smul.addr %s258, 16
          %s260 = scalar_lea.hbm %s2, %s259
          %s262 = sshll.u32 %s251, 4
          %s263 = int_to_ptr.vmem [resolvable:$true] %s262
          %265 = dma.vmem_to_hbm [thread:$0]  %s263, 16, %s260, %s249
        $region40: #{tpu_custom_call.1} parent=27 // pred_fallthru
          _
      $region28: #{tpu_custom_call.1} parent=5 // pred_fallthru
        _
      %p266 = scmp.le.s32.totalorder 2, %s17
      // Predicated region
      $region41: #{tpu_custom_call.1} parent=5 // pred_check
        %p267 = pneg %p266
      $region42: #{tpu_custom_call.1} parent=5 // pred_check_branch
        %269 = sbr.rel (%p267) target = $region44
      $region43: #{tpu_custom_call.1} parent=5 // pred_region
        %s270 = ssub.s32 %s17, 2
        // Predicated region
        $region45: #{tpu_custom_call.1} parent=43 // pred_check
          %p271 = pneg %p116
        $region46: #{tpu_custom_call.1} parent=43 // pred_check_branch
          %273 = sbr.rel (%p271) target = $region48
        $region47: #{tpu_custom_call.1} parent=43 // pred_region
          %s274 = sand.u32 %s101, 1
          %s275 = scalar_lea.sflag [#allocation4], %s274
          %s276 = sand.u32 %s101, 1
          %s277 = scalar_lea.vmem [#allocation7], %s276
          %278 = dma.done %s275, 16
        $region48: #{tpu_custom_call.1} parent=43 // pred_fallthru
          _
      $region44: #{tpu_custom_call.1} parent=5 // pred_fallthru
        _
    $region6: #{tpu_custom_call.1} parent=1 // loop_footer
      %s21 = sadd.s32 1, %s17
    $region7: #{tpu_custom_call.1} parent=1 // loop_footer_branch
      %16 = sbr.rel target = $region3
    $region8: #{tpu_custom_call.1} parent=1 // loop_exit
      _
    %279 = vsyncpa [#allocation3], 1
    %s280 = scalar_lea.sflag [#allocation3], 1
    %281 = vsyncpa %s280, 1
    %282 = vsyncpa [#allocation6], 1
    %s283 = scalar_lea.sflag [#allocation6], 1
    %284 = vsyncpa %s283, 1
    %285 = vsyncpa [#allocation4], 1
    %s286 = scalar_lea.sflag [#allocation4], 1
    %287 = vsyncpa %s286, 1

</llo_original>
